<compile_context>
chip_gen: v5e
topology: v5e:2x2
jax: 0.10.0
libtpu: 0.0.40
codegen_flags: <defaults>
</compile_context>

<pallas_src>
import math
import numpy as np
import jax
import jax.numpy as jnp
from jax.experimental import pallas as pl
from jax.experimental.pallas import tpu as pltpu

_PACK = 4  # batch rows packed per vector row (PACK * D = 128 lanes for D=32)


def _round_up(a: int, b: int) -> int:
    return (a + b - 1) // b * b


def _cdiv(a: int, b: int) -> int:
    return (a + b - 1) // b


def _hca_kernel(x_ref, sub_ref, wg_ref, out_ref):
    # x_ref:   (TBp, P*D)       packed batch tile (P samples per row), streamed
    # sub_ref: (P*D, P*C*S)     block-diag subclass centroids^T, bf16, resident
    # wg_ref:  (P*C*S, 2*P*C)   [W_bd | G_bd]: fused numerator / denominator
    # out_ref: (TBp, P*C)
    a = x_ref[...].astype(sub_ref.dtype)                              # bf16 MXU feed
    scores = jnp.dot(a, sub_ref[...],
                     preferred_element_type=jnp.float32)              # (TBp, 128)
    # Global per-packed-row max: exact (the shift cancels within each softmax
    # group); single XLU reduce instead of many narrow segment reductions.
    m = jnp.max(scores, axis=-1, keepdims=True)                       # (TBp, 1)
    p = jnp.exp(scores - m)                                           # (TBp, 128)
    r = jnp.dot(p.astype(wg_ref.dtype), wg_ref[...],
                preferred_element_type=jnp.float32)                   # (TBp, 2*P*C)
    pc = wg_ref.shape[1] // 2
    num = r[:, :pc]                                                   # (TBp, P*C)
    den = r[:, pc:] + 1e-12                                           # (TBp, P*C)
    inv = pl.reciprocal(den, approx=True)                             # EUP
    inv = inv * (2.0 - den * inv)                                     # one Newton step
    out_ref[...] = (num * inv).astype(out_ref.dtype)


def hierarchical_cross_attention(x, subclass_centroids, attention_weights,
                                 class_centroids, *, tile_b=8192):
    B, D = x.shape
    C, S, D2 = subclass_centroids.shape
    assert D == D2 and attention_weights.shape == (S, D) \
        and class_centroids.shape == (C, D)

    P = _PACK
    f32, bf16 = jnp.float32, jnp.bfloat16

    # ---- one-time parameter plumbing / algebraic fusion (outside the kernel) ----
    sub_t = jnp.transpose(subclass_centroids.astype(f32).reshape(C * S, D))   # (D, C*S)
    m_sc = jnp.dot(attention_weights.astype(f32),
                   class_centroids.astype(f32).T)                             # (S, C)
    eye_c = jnp.eye(C, dtype=f32)
    w_single = (eye_c[:, None, :] * m_sc[None, :, :]).reshape(C * S, C)       # numerator
    g_single = jnp.repeat(eye_c, S, axis=0)                                   # denominator
    eye_p = jnp.eye(P, dtype=f32)
    sub_bd = jnp.kron(eye_p, sub_t).astype(bf16)                              # (P*D, P*C*S)
    wg_bd = jnp.concatenate([jnp.kron(eye_p, w_single),
                             jnp.kron(eye_p, g_single)], axis=1).astype(bf16) # (P*C*S, 2*P*C)

    # ---- batch packing & tiling ----
    bp = _cdiv(B, P)                                  # packed rows needed
    tbp = min(max(tile_b // P, 8), _round_up(bp, 8))  # packed-row tile
    tbp = _round_up(tbp, 8)
    # v7x megacore: keep >= 2 grid steps when there is enough work to split.
    if _cdiv(bp, tbp) < 2 and bp >= 256:
        tbp = _round_up(_cdiv(bp, 2), 8)
    bp_pad = _round_up(bp, tbp)
    b_total = bp_pad * P
    if b_total != B:
        x = jnp.pad(x, ((0, b_total - B), (0, 0)))
    x_packed = x.reshape(bp_pad, P * D)               # contiguous, free
    grid = (bp_pad // tbp,)

    cost = pl.CostEstimate(
        flops=int(2 * bp_pad * (P * D) * (P * C * S)
                  + 2 * bp_pad * (P * C * S) * (2 * P * C)),
        transcendentals=int(bp_pad * P * C * S),
        bytes_accessed=int(x_packed.size * x_packed.dtype.itemsize
                           + sub_bd.size * 2 + wg_bd.size * 2
                           + bp_pad * P * C * 4),
    )

    out_packed = pl.pallas_call(
        _hca_kernel,
        out_shape=jax.ShapeDtypeStruct((bp_pad, P * C), f32),
        grid=grid,
        in_specs=[
            pl.BlockSpec((tbp, P * D), lambda i: (i, 0)),       # x: streamed per tile
            pl.BlockSpec((P * D, P * C * S), lambda i: (0, 0)), # params: VMEM-resident
            pl.BlockSpec((P * C * S, 2 * P * C), lambda i: (0, 0)),
        ],
        out_specs=pl.BlockSpec((tbp, P * C), lambda i: (i, 0)),
        compiler_params=pltpu.CompilerParams(
            dimension_semantics=("parallel",),                  # megacore split on v7x
            vmem_limit_bytes=32 * 1024 * 1024),                 # v5e headroom for big tiles
        cost_estimate=cost,
    )(x_packed, sub_bd, wg_bd)

    return out_packed.reshape(b_total, C)[:B]


def reference(x, subclass_centroids, attention_weights, class_centroids):
    B, D = x.shape
    C, S, _ = subclass_centroids.shape
    sub_flat = subclass_centroids.reshape(C * S, D)
    scores = jnp.einsum('ik,lk->il', x, sub_flat).reshape(B, C, S)
    attn = jax.nn.softmax(scores, axis=2)
    attended = jnp.einsum('bnm,mk->bnk', attn, attention_weights)
    sims = jnp.einsum('bik,kj->bij', attended, class_centroids.T)
    return jnp.diagonal(sims, axis1=-2, axis2=-1)


def init_params(key, input_dim, num_clusters, num_subclasses):
    # Deterministic, kaiming_normal_(mode='fan_out', nonlinearity='relu')-style init.
    k1, k2, k3 = jax.random.split(key, 3)
    gain = math.sqrt(2.0)
    class_centroids = jax.random.normal(k1, (num_clusters, input_dim),
                                        jnp.float32) * (gain / math.sqrt(num_clusters))
    subclass_centroids = jax.random.normal(k2, (num_clusters, num_subclasses, input_dim),
                                           jnp.float32) * (gain / math.sqrt(num_clusters * input_dim))
    attention_weights = jax.random.normal(k3, (num_subclasses, input_dim),
                                          jnp.float32) * (gain / math.sqrt(num_subclasses))
    return class_centroids, subclass_centroids, attention_weights


if __name__ == "__main__":
    D, C, S = 32, 4, 8  # input_dim, num_clusters, num_subclasses

    key = jax.random.PRNGKey(0)
    kx, kp, kx2 = jax.random.split(key, 3)
    class_centroids, subclass_centroids, attention_weights = init_params(kp, D, C, S)

    # Tolerances account for bf16 MXU operands (f32 accumulation) plus the fused
    # softmax/diagonal algebra; structural errors would be O(1).
    # Small batch (single tile, packed-row padding path).
    x_small = jax.random.normal(kx, (8, D), jnp.float32)
    out = jax.block_until_ready(
        hierarchical_cross_attention(x_small, subclass_centroids,
                                     attention_weights, class_centroids))
    ref = reference(x_small, subclass_centroids, attention_weights, class_centroids)
    np.testing.assert_allclose(np.asarray(out), np.asarray(ref), rtol=2e-2, atol=2e-2)

    # Larger, non-tile-multiple batch (exercises the multi-step grid + padding).
    x_big = jax.random.normal(kx2, (300, D), jnp.float32)
    out2 = jax.block_until_ready(
        hierarchical_cross_attention(x_big, subclass_centroids,
                                     attention_weights, class_centroids, tile_b=256))
    ref2 = reference(x_big, subclass_centroids, attention_weights, class_centroids)
    np.testing.assert_allclose(np.asarray(out2), np.asarray(ref2), rtol=2e-2, atol=2e-2)

    print("KERNEL_OK")
</pallas_src>

<mosaic_0001>
module attributes {stable_mosaic.version = 11 : i64} {
  func.func @_hca_kernel(%arg0: i32, %arg1: memref<8x128xf32, #tpu.memory_space<vmem>>, %arg2: memref<128x128xbf16, #tpu.memory_space<vmem>>, %arg3: memref<128x32xbf16, #tpu.memory_space<vmem>>, %arg4: memref<8x16xf32, #tpu.memory_space<vmem>>) attributes {dimension_semantics = [#tpu.dimension_semantics<parallel>], iteration_bounds = array<i64: 1>, scalar_prefetch = 0 : i64, scratch_operands = 0 : i64, tpu.core_type = #tpu.core_type<tc>, window_params = [{transform_indices = @transform_0, window_bounds = array<i64: 8, 128>}, {pipeline_mode = #tpu.pipeline_mode<synchronous>, transform_indices = @transform_1, window_bounds = array<i64: 128, 128>}, {pipeline_mode = #tpu.pipeline_mode<synchronous>, transform_indices = @transform_2, window_bounds = array<i64: 128, 32>}, {transform_indices = @transform_3, window_bounds = array<i64: 8, 16>}]} {
    %c0 = arith.constant 0 : index
    %c0_0 = arith.constant 0 : index
    %0 = vector.load %arg1[%c0, %c0_0] : memref<8x128xf32, #tpu.memory_space<vmem>>, vector<8x128xf32>
    %1 = arith.truncf %0 : vector<8x128xf32> to vector<8x128xbf16>
    %c0_1 = arith.constant 0 : index
    %c0_2 = arith.constant 0 : index
    %2 = vector.load %arg2[%c0_1, %c0_2] : memref<128x128xbf16, #tpu.memory_space<vmem>>, vector<128x128xbf16>
    %cst = arith.constant dense<0.000000e+00> : vector<8x128xf32>
    %3 = tpu.matmul %1, %2, %cst {dimension_numbers = #tpu.dot_dimension_numbers<[1], [0], [0], [1], [0, 0, 1, 1], [], []>} : vector<8x128xbf16>, vector<128x128xbf16>, vector<8x128xf32> -> vector<8x128xf32>
    %cst_3 = arith.constant dense<0xFF800000> : vector<8xf32>
    %4 = vector.multi_reduction <maximumf>, %3, %cst_3 [1] : vector<8x128xf32> to vector<8xf32>
    %5 = vector.shape_cast %4 : vector<8xf32> to vector<8x1xf32>
    %6 = vector.broadcast %5 : vector<8x1xf32> to vector<8x128xf32>
    %7 = arith.subf %3, %6 : vector<8x128xf32>
    %8 = math.exp %7 : vector<8x128xf32>
    %9 = arith.truncf %8 : vector<8x128xf32> to vector<8x128xbf16>
    %c0_4 = arith.constant 0 : index
    %c0_5 = arith.constant 0 : index
    %10 = vector.load %arg3[%c0_4, %c0_5] : memref<128x32xbf16, #tpu.memory_space<vmem>>, vector<128x32xbf16>
    %cst_6 = arith.constant dense<0.000000e+00> : vector<8x32xf32>
    %11 = tpu.matmul %9, %10, %cst_6 {dimension_numbers = #tpu.dot_dimension_numbers<[1], [0], [0], [1], [0, 0, 1, 1], [], []>} : vector<8x128xbf16>, vector<128x32xbf16>, vector<8x32xf32> -> vector<8x32xf32>
    %12 = vector.extract_strided_slice %11 {offsets = [0, 0], sizes = [8, 16], strides = [1, 1]} : vector<8x32xf32> to vector<8x16xf32>
    %13 = vector.extract_strided_slice %11 {offsets = [0, 16], sizes = [8, 16], strides = [1, 1]} : vector<8x32xf32> to vector<8x16xf32>
    %cst_7 = arith.constant 9.99999996E-13 : f32
    %14 = vector.broadcast %cst_7 : f32 to vector<8x16xf32>
    %15 = arith.addf %13, %14 : vector<8x16xf32>
    %16 = tpu.reciprocal %15 {approx = true} : vector<8x16xf32> -> vector<8x16xf32>
    %17 = arith.mulf %15, %16 : vector<8x16xf32>
    %cst_8 = arith.constant 2.000000e+00 : f32
    %18 = vector.broadcast %cst_8 : f32 to vector<8x16xf32>
    %19 = arith.subf %18, %17 : vector<8x16xf32>
    %20 = arith.mulf %16, %19 : vector<8x16xf32>
    %21 = arith.mulf %12, %20 : vector<8x16xf32>
    %c0_9 = arith.constant 0 : index
    %c0_10 = arith.constant 0 : index
    %22 = vector.load %arg4[%c0_9, %c0_10] : memref<8x16xf32, #tpu.memory_space<vmem>>, vector<8x16xf32>
    tpu.vector_store %arg4[%c0_9, %c0_10], %21 {strides = array<i32>} : memref<8x16xf32, #tpu.memory_space<vmem>>, vector<8x16xf32>,
    return
  }
  func.func @transform_0(%arg0: i32) -> (i32, i32) {
    %c0_i32 = arith.constant 0 : i32
    %c0_i32_0 = arith.constant 0 : i32
    return %arg0, %c0_i32 : i32, i32
  }
  func.func @transform_1(%arg0: i32) -> (i32, i32) {
    %c0_i32 = arith.constant 0 : i32
    %c0_i32_0 = arith.constant 0 : i32
    %c0_i32_1 = arith.constant 0 : i32
    return %c0_i32, %c0_i32_0 : i32, i32
  }
  func.func @transform_2(%arg0: i32) -> (i32, i32) {
    %c0_i32 = arith.constant 0 : i32
    %c0_i32_0 = arith.constant 0 : i32
    %c0_i32_1 = arith.constant 0 : i32
    return %c0_i32, %c0_i32_0 : i32, i32
  }
  func.func @transform_3(%arg0: i32) -> (i32, i32) {
    %c0_i32 = arith.constant 0 : i32
    %c0_i32_0 = arith.constant 0 : i32
    return %arg0, %c0_i32 : i32, i32
  }
}

</mosaic_0001>

<llo_original>
// kernel: tpu_custom_call.1
$region0: #{tpu_custom_call.1}
  #allocation0 [shape = 'u32[]', space=smem, size = 0x4, offset = 0x4, fixed_abs, tag = 'smem constant byte address 0x4 - core index']
  #allocation1 [shape = 'u32[72,128]{1,0:T(1,128)}', space=vmem, size = 0x9000, scoped, tag = 'internal scratch']
  %s0 = inlined_call_operand.vmem [shape: f32[8,128], index: 0, kind: input, shape index: {}]
  %s1 = inlined_call_operand.vmem [shape: bf16[128,128], index: 1, kind: input, shape index: {}]
  %s2 = inlined_call_operand.vmem [shape: bf16[128,32], index: 2, kind: input, shape index: {}]
  %s3 = inlined_call_operand.hbm [shape: f32[8,16], index: 3, kind: output, shape index: {}]
  %s4 = sld [smem:[#allocation0]]
  $region22: #{tpu_custom_call.1} parent=0
    _
  %s6 = ssub.s32 1, %s4
  %s7 = scalar_select 0, %s6, %s4
  $region1: #{tpu_custom_call.1} parent=0
    #allocation2 [shape = 'u8[4096]{0}', space=vmem, size = 0x1000, scoped, tag = 'output window, operand 0, single buffered']
    #allocation3 [shape = 's32[1]{0}', space=sflag, size = 0x4, scoped, tag = 'scoped memory for tpu_custom_call.1']
    %8 = vsyncpa [#allocation3], 0
    // Predicated region
    $region2: #{tpu_custom_call.1} parent=1 // pred_check
      _
    $region3: #{tpu_custom_call.1} parent=1 // pred_check_branch
      %10 = sbr.rel (0) target = $region5
    $region4: #{tpu_custom_call.1} parent=1 // pred_region
      _
    $region5: #{tpu_custom_call.1} parent=1 // pred_fallthru
      _
    // Predicated region
    $region6: #{tpu_custom_call.1} parent=1 // pred_check
      _
    $region7: #{tpu_custom_call.1} parent=1 // pred_check_branch
      %12 = sbr.rel (0) target = $region9
    $region8: #{tpu_custom_call.1} parent=1 // pred_region
      _
    $region9: #{tpu_custom_call.1} parent=1 // pred_fallthru
      _
    // Predicated region
    $region10: #{tpu_custom_call.1} parent=1 // pred_check
      _
    $region11: #{tpu_custom_call.1} parent=1 // pred_check_branch
      %14 = sbr.rel (0) target = $region13
    $region12: #{tpu_custom_call.1} parent=1 // pred_region
      _
    $region13: #{tpu_custom_call.1} parent=1 // pred_fallthru
      _
    %v15 = vld [vmem:[%s0] sm:$0xff]
    %v16 = vpack.c.bf16 %v15, %v15
    %v17 = vld [vmem:[%s1] sm:$0xf]
    %v18 = vld [vmem:[%s1 + $0x4] sm:$0xf]
    %v19 = vld [vmem:[%s1 + $0x8] sm:$0xf]
    %v20 = vld [vmem:[%s1 + $0xc] sm:$0xf]
    %v21 = vld [vmem:[%s1 + $0x10] sm:$0xf]
    %v22 = vld [vmem:[%s1 + $0x14] sm:$0xf]
    %v23 = vld [vmem:[%s1 + $0x18] sm:$0xf]
    %v24 = vld [vmem:[%s1 + $0x1c] sm:$0xf]
    %v25 = vld [vmem:[%s1 + $0x20] sm:$0xf]
    %v26 = vld [vmem:[%s1 + $0x24] sm:$0xf]
    %v27 = vld [vmem:[%s1 + $0x28] sm:$0xf]
    %v28 = vld [vmem:[%s1 + $0x2c] sm:$0xf]
    %v29 = vld [vmem:[%s1 + $0x30] sm:$0xf]
    %v30 = vld [vmem:[%s1 + $0x34] sm:$0xf]
    %v31 = vld [vmem:[%s1 + $0x38] sm:$0xf]
    %v32 = vld [vmem:[%s1 + $0x3c] sm:$0xf]
    %v49 = vunpack.c.l.b16 %v17
    %v50 = vunpack.c.l.b16 %v18
    %v51 = vunpack.c.l.b16 %v19
    %v52 = vunpack.c.l.b16 %v20
    %v53 = vunpack.c.l.b16 %v21
    %v54 = vunpack.c.l.b16 %v22
    %v55 = vunpack.c.l.b16 %v23
    %v56 = vunpack.c.l.b16 %v24
    %v57 = vunpack.c.l.b16 %v25
    %v58 = vunpack.c.l.b16 %v26
    %v59 = vunpack.c.l.b16 %v27
    %v60 = vunpack.c.l.b16 %v28
    %v61 = vunpack.c.l.b16 %v29
    %v62 = vunpack.c.l.b16 %v30
    %v63 = vunpack.c.l.b16 %v31
    %v64 = vunpack.c.l.b16 %v32
    %v65 = vpack.c.b16 %v50, %v49
    %v66 = vpack.c.b16 %v52, %v51
    %v67 = vpack.c.b16 %v54, %v53
    %v68 = vpack.c.b16 %v56, %v55
    %v69 = vpack.c.b16 %v58, %v57
    %v70 = vpack.c.b16 %v60, %v59
    %v71 = vpack.c.b16 %v62, %v61
    %v72 = vpack.c.b16 %v64, %v63
    %81 = vmatpush.bf16.msra.mxu0 %v72
    %82 = vmatpush.bf16.msra.mxu0 %v71
    %83 = vmatpush.bf16.msra.mxu0 %v70
    %84 = vmatpush.bf16.msra.mxu0 %v69
    %85 = vmatpush.bf16.msra.mxu0 %v68
    %86 = vmatpush.bf16.msra.mxu0 %v67
    %87 = vmatpush.bf16.msra.mxu0 %v66
    %88 = vmatpush.bf16.msra.mxu0 %v65
    %89 = vmatmul.bf16.gmra.mxu0 %v16
    %v90 = vpop.f32.mrf.mxu0
    %v91 = vadd.f32 0.0, %v90
    %v92 = vpop.f32.mrf.mxu0
    %93 = vdwg.mxu0
    %94 = vmax.xlane.f32.xlu0 %v91
    %v95 = vpop.xlane.xlu0 %94
    %v96 = vsub.f32 %v91, %v95
    %v97 = vmul.f32 %v96, 1.442695
    %v98 = vpow.pop %v97
    %v99 = vpack.c.bf16 %v98, %v98
    %v100 = vld [vmem:[%s2] sm:$0xf]
    %v101 = vld [vmem:[%s2 + $0x4] sm:$0xf]
    %v102 = vld [vmem:[%s2 + $0x8] sm:$0xf]
    %v103 = vld [vmem:[%s2 + $0xc] sm:$0xf]
    %v104 = vld [vmem:[%s2 + $0x10] sm:$0xf]
    %v105 = vld [vmem:[%s2 + $0x14] sm:$0xf]
    %v106 = vld [vmem:[%s2 + $0x18] sm:$0xf]
    %v107 = vld [vmem:[%s2 + $0x1c] sm:$0xf]
    %v108 = vld [vmem:[%s2 + $0x20] sm:$0xf]
    %v109 = vld [vmem:[%s2 + $0x24] sm:$0xf]
    %v110 = vld [vmem:[%s2 + $0x28] sm:$0xf]
    %v111 = vld [vmem:[%s2 + $0x2c] sm:$0xf]
    %v112 = vld [vmem:[%s2 + $0x30] sm:$0xf]
    %v113 = vld [vmem:[%s2 + $0x34] sm:$0xf]
    %v114 = vld [vmem:[%s2 + $0x38] sm:$0xf]
    %v115 = vld [vmem:[%s2 + $0x3c] sm:$0xf]
    %v132 = vunpack.c.l.b16 %v100
    %v133 = vunpack.c.l.b16 %v101
    %v134 = vunpack.c.l.b16 %v102
    %v135 = vunpack.c.l.b16 %v103
    %v136 = vunpack.c.l.b16 %v104
    %v137 = vunpack.c.l.b16 %v105
    %v138 = vunpack.c.l.b16 %v106
    %v139 = vunpack.c.l.b16 %v107
    %v140 = vunpack.c.l.b16 %v108
    %v141 = vunpack.c.l.b16 %v109
    %v142 = vunpack.c.l.b16 %v110
    %v143 = vunpack.c.l.b16 %v111
    %v144 = vunpack.c.l.b16 %v112
    %v145 = vunpack.c.l.b16 %v113
    %v146 = vunpack.c.l.b16 %v114
    %v147 = vunpack.c.l.b16 %v115
    %v148 = vpack.c.b16 %v133, %v132
    %v149 = vpack.c.b16 %v135, %v134
    %v150 = vpack.c.b16 %v137, %v136
    %v151 = vpack.c.b16 %v139, %v138
    %v152 = vpack.c.b16 %v141, %v140
    %v153 = vpack.c.b16 %v143, %v142
    %v154 = vpack.c.b16 %v145, %v144
    %v155 = vpack.c.b16 %v147, %v146
    %164 = vmatpush.bf16.msra.mxu0 %v155
    %165 = vmatpush.bf16.msra.mxu0 %v154
    %166 = vmatpush.bf16.msra.mxu0 %v153
    %167 = vmatpush.bf16.msra.mxu0 %v152
    %168 = vmatpush.bf16.msra.mxu0 %v151
    %169 = vmatpush.bf16.msra.mxu0 %v150
    %170 = vmatpush.bf16.msra.mxu0 %v149
    %171 = vmatpush.bf16.msra.mxu0 %v148
    %172 = vmatmul.bf16.gmra.mxu0 %v99
    %v173 = vpop.f32.mrf.mxu0
    %v174 = vadd.f32 0.0, %v173
    %v175 = vpop.f32.mrf.mxu0
    %176 = vdwg.mxu0
    %v177 = vadd.f32 %v174, 1e-12
    %v178 = vrcp.pop %v177
    %v179 = vmul.f32 %v177, %v178
    %v180 = vsub.f32 2.0, %v179
    %v181 = vmul.f32 %v178, %v180
    %183 = vrot.lane.b32.xlu0 %v181, 112
    %v184 = vpop.permute.xlu0 %183
    %v186 = vmul.f32 %v174, %v184
    %vm187 = vcmask 130048
    %188 = vst.msk [vmem:[#allocation2] sm:$0xff] %vm187, %v186
    // Predicated region
    $region14: #{tpu_custom_call.1} parent=1 // pred_check
      _
    $region15: #{tpu_custom_call.1} parent=1 // pred_check_branch
      %190 = sbr.rel (0) target = $region17
    $region16: #{tpu_custom_call.1} parent=1 // pred_region
      %192 = vsyncadd [#allocation3], 0
      %s194 = sshll.u32 [#allocation2], 4
      %s195 = int_to_ptr.vmem [resolvable:$true] %s194
      %s196 = sshll.u32 %s3, 4
      %s197 = int_to_ptr.hbm [resolvable:$true] %s196
      %199 = dma.vmem_to_hbm [thread:$0]  %s195, 128, %s197, [#allocation3]
    $region17: #{tpu_custom_call.1} parent=1 // pred_fallthru
      _
    // Predicated region
    $region18: #{tpu_custom_call.1} parent=1 // pred_check
      _
    $region19: #{tpu_custom_call.1} parent=1 // pred_check_branch
      %201 = sbr.rel (0) target = $region21
    $region20: #{tpu_custom_call.1} parent=1 // pred_region
      %203 = dma.done [#allocation3], 128
    $region21: #{tpu_custom_call.1} parent=1 // pred_fallthru
      _
    %204 = vsyncpa [#allocation3], 1

</llo_original>
